<compile_context>
chip_gen: v6e
topology: v6e:2x2x1
jax: 0.10.0
libtpu: 0.0.40
codegen_flags: <defaults>
</compile_context>

<pallas_src>
import jax
import jax.numpy as jnp
from jax.experimental import pallas as pl
from jax.experimental.pallas import tpu as pltpu


LANE = 128  # lane width of a TPU vreg / MXU pass


def _round_up(x, m):
    return ((x + m - 1) // m) * m


def _cdiv(a, b):
    return (a + b - 1) // b


# ----------------------------------------------------------------------------
# Kernel: fused 3-layer MLP on one batch tile.
# ----------------------------------------------------------------------------
def _mlp_kernel(x_ref, w1_ref, b1_ref, w2_ref, b2_ref, w3_ref, b3_ref, out_ref):
    # x: (TILE_B, in+1)  -- full state; the extra column is absorbed by the
    # zero row appended to w1, so no host-side slice is needed.
    x = x_ref[...].astype(jnp.bfloat16)

    h1 = jnp.dot(x, w1_ref[...], preferred_element_type=jnp.float32) + b1_ref[...]
    h1 = jnp.maximum(h1, 0.0).astype(jnp.bfloat16)

    h2 = jnp.dot(h1, w2_ref[...], preferred_element_type=jnp.float32) + b2_ref[...]
    h2 = jnp.maximum(h2, 0.0).astype(jnp.bfloat16)

    out = jnp.dot(h2, w3_ref[...], preferred_element_type=jnp.float32) + b3_ref[...]
    out_ref[...] = out.astype(out_ref.dtype)


# ----------------------------------------------------------------------------
# Parameter preparation: pad hidden dim to 128 lanes, cast weights to bf16.
# Done ONCE, outside the per-step forward.
# ----------------------------------------------------------------------------
def prepare_params(params, input_size, hidden_size):
    out_dim = 2 * input_size
    h_pad = _round_up(hidden_size, LANE)

    # w1: (in, H) -> (in + 1, H_pad).  The appended zero ROW absorbs the
    # dropped last state column (state[:, :-1] in the PyTorch module).
    w1 = jnp.zeros((input_size + 1, h_pad), jnp.float32)
    w1 = w1.at[:input_size, :hidden_size].set(params["w1"])
    b1 = jnp.zeros((1, h_pad), jnp.float32).at[:, :hidden_size].set(params["b1"])

    w2 = jnp.zeros((h_pad, h_pad), jnp.float32)
    w2 = w2.at[:hidden_size, :hidden_size].set(params["w2"])
    b2 = jnp.zeros((1, h_pad), jnp.float32).at[:, :hidden_size].set(params["b2"])

    # Output columns are NOT padded to 128: a block last-dim equal to the full
    # array dim is legal, and it avoids a 4x-wider HBM output stream plus the
    # wrapper column slice.
    w3 = jnp.zeros((h_pad, out_dim), jnp.float32)
    w3 = w3.at[:hidden_size, :].set(params["w_fwp"])
    b3 = params["b_fwp"].reshape(1, out_dim).astype(jnp.float32)

    # NOTE: padded hidden lanes stay exactly zero only because the padded
    # biases are zero and ReLU(0) == 0.  If the activation or the bias padding
    # ever changes (e.g. GELU, nonzero pad), padded lanes would leak into the
    # w3 contraction.
    assert float(jnp.abs(b1[:, hidden_size:]).max() if h_pad > hidden_size else 0.0) == 0.0
    assert float(jnp.abs(b2[:, hidden_size:]).max() if h_pad > hidden_size else 0.0) == 0.0

    return {
        "w1": w1.astype(jnp.bfloat16), "b1": b1,
        "w2": w2.astype(jnp.bfloat16), "b2": b2,
        "w3": w3.astype(jnp.bfloat16), "b3": b3,
        "input_size": input_size,
        "out_dim": out_dim,
        "h_pad": h_pad,
    }


# ----------------------------------------------------------------------------
# Forward wrapper.
# ----------------------------------------------------------------------------
def gflownet_ising_void_forward(state, prep, *, tile_b=1024, out_dtype=jnp.float32):
    """state: [B, input_size + 1] float32.  Returns (fwp [B, 2*in], ones [B,1])."""
    B, in_full = state.shape
    assert in_full == prep["input_size"] + 1

    h_pad = prep["h_pad"]
    out_dim = prep["out_dim"]
    out_isz = jnp.dtype(out_dtype).itemsize

    # Batch tile: multiple of 8 sublanes, capped so the grid has >= 2 steps
    # whenever B > 8 (so v7x's two TensorCores both get work on the
    # "parallel" axis).
    tb = max(8, min(tile_b, _round_up(_cdiv(B, 2), 8)))

    # Keep the estimated VMEM footprint well under the smallest scoped
    # default (v7x: 32 MiB): double-buffered x/out tiles + double-buffered
    # weights/biases + f32 hidden temporaries.
    weight_bytes = ((in_full + h_pad) * h_pad + h_pad * out_dim) * 2 \
        + (2 * h_pad + out_dim) * 4

    def _vmem_bytes(t):
        x_io = 2 * t * in_full * 4
        out_io = 2 * t * out_dim * out_isz
        act = 2 * t * h_pad * 4
        return x_io + out_io + 2 * weight_bytes + act

    while tb > 8 and _vmem_bytes(tb) > 24 * 1024 * 1024:
        tb = max(8, _round_up(tb // 2, 8))

    grid = (_cdiv(B, tb),)  # non-divisible B: Pallas masks the partial block

    cost = pl.CostEstimate(
        flops=2 * B * (in_full * h_pad + h_pad * h_pad + h_pad * out_dim),
        transcendentals=0,
        bytes_accessed=B * in_full * 4 + B * out_dim * out_isz + weight_bytes,
    )

    fwp = pl.pallas_call(
        _mlp_kernel,
        out_shape=jax.ShapeDtypeStruct((B, out_dim), out_dtype),
        grid=grid,
        in_specs=[
            pl.BlockSpec((tb, in_full), lambda i: (i, 0)),       # x (streamed)
            pl.BlockSpec((in_full, h_pad), lambda i: (0, 0)),    # w1 (resident)
            pl.BlockSpec((1, h_pad), lambda i: (0, 0)),          # b1
            pl.BlockSpec((h_pad, h_pad), lambda i: (0, 0)),      # w2
            pl.BlockSpec((1, h_pad), lambda i: (0, 0)),          # b2
            pl.BlockSpec((h_pad, out_dim), lambda i: (0, 0)),    # w3
            pl.BlockSpec((1, out_dim), lambda i: (0, 0)),        # b3
        ],
        out_specs=pl.BlockSpec((tb, out_dim), lambda i: (i, 0)),
        compiler_params=pltpu.CompilerParams(
            dimension_semantics=("parallel",),
        ),
        cost_estimate=cost,
    )(state, prep["w1"], prep["b1"], prep["w2"], prep["b2"], prep["w3"], prep["b3"])

    ones = jnp.ones((B, 1), dtype=jnp.float32)
    return fwp, ones


# ----------------------------------------------------------------------------
# Init (mimics nn.Linear uniform +/- 1/sqrt(fan_in)); bwp / log_Z kept for
# shape fidelity but unused by forward().
# ----------------------------------------------------------------------------
def init_params(lattice_h, lattice_w, hidden_size, key):
    input_size = lattice_h * lattice_w
    fwd_out = 2 * input_size
    bwd_out = input_size

    ks = jax.random.split(key, 8)

    def linear(kw, kb, fan_in, fan_out):
        bound = 1.0 / jnp.sqrt(jnp.float32(fan_in))
        # stored as [in, out] (transposed vs PyTorch's [out, in])
        w = jax.random.uniform(kw, (fan_in, fan_out), jnp.float32, -bound, bound)
        b = jax.random.uniform(kb, (1, fan_out), jnp.float32, -bound, bound)
        return w, b

    w1, b1 = linear(ks[0], ks[1], input_size, hidden_size)
    w2, b2 = linear(ks[2], ks[3], hidden_size, hidden_size)
    w_fwp, b_fwp = linear(ks[4], ks[5], hidden_size, fwd_out)
    w_bwp, b_bwp = linear(ks[6], ks[7], hidden_size, bwd_out)
    log_Z = jnp.zeros((1,), jnp.float32)

    return {
        "w1": w1, "b1": b1,
        "w2": w2, "b2": b2,
        "w_fwp": w_fwp, "b_fwp": b_fwp,
        "w_bwp": w_bwp, "b_bwp": b_bwp,
        "log_Z": log_Z,
    }


def _reference_forward(state, params):
    """Pure-JAX f32 reference of the PyTorch forward (correctness check)."""
    x = state[:, :-1]
    h = jnp.maximum(x @ params["w1"] + params["b1"], 0.0)
    h = jnp.maximum(h @ params["w2"] + params["b2"], 0.0)
    fwp = h @ params["w_fwp"] + params["b_fwp"]
    return fwp, jnp.ones((state.shape[0], 1), jnp.float32)


if __name__ == "__main__":
    key = jax.random.PRNGKey(0)
    k_param, k_state, k_state2 = jax.random.split(key, 3)

    # Small shapes: 4x4 Ising lattice -> input_size=16, hidden=32, batch=8.
    LAT_H, LAT_W = 4, 4
    HIDDEN = 32
    BATCH = 8
    input_size = LAT_H * LAT_W

    params = init_params(LAT_H, LAT_W, HIDDEN, k_param)
    prep = prepare_params(params, input_size, HIDDEN)

    # state has input_size + 1 columns (last one is dropped in forward).
    state = jax.random.normal(k_state, (BATCH, input_size + 1), jnp.float32)

    fwp, ones = gflownet_ising_void_forward(state, prep)
    jax.block_until_ready(fwp)
    jax.block_until_ready(ones)

    ref_fwp, ref_ones = _reference_forward(state, params)
    assert fwp.shape == (BATCH, 2 * input_size)
    assert ones.shape == (BATCH, 1)
    # bf16 matmul operands with f32 accumulation -> loose-ish tolerance.
    # TODO(synk): bf16 operands add ~1e-3 relative error vs the f32 PyTorch
    # reference; acceptable for GFlowNet log-prob use, tighten if needed.
    assert jnp.allclose(fwp, ref_fwp, atol=3e-2, rtol=3e-2)
    assert jnp.allclose(ones, ref_ones)

    # Second check: a batch that is not a multiple of the tile, exercising the
    # masked partial trailing block (no host-side pad / slice anymore) and a
    # grid of >= 2 steps.
    B2 = 37
    state2 = jax.random.normal(k_state2, (B2, input_size + 1), jnp.float32)
    fwp2, ones2 = gflownet_ising_void_forward(state2, prep)
    jax.block_until_ready(fwp2)
    ref_fwp2, _ = _reference_forward(state2, params)
    assert fwp2.shape == (B2, 2 * input_size)
    assert ones2.shape == (B2, 1)
    assert jnp.allclose(fwp2, ref_fwp2, atol=3e-2, rtol=3e-2)

    print("KERNEL_OK")
</pallas_src>

<mosaic_0001>
module attributes {stable_mosaic.version = 11 : i64} {
  func.func @_mlp_kernel(%arg0: i32, %arg1: memref<8x17xf32, #tpu.memory_space<vmem>>, %arg2: memref<17x128xbf16, #tpu.memory_space<vmem>>, %arg3: memref<1x128xf32, #tpu.memory_space<vmem>>, %arg4: memref<128x128xbf16, #tpu.memory_space<vmem>>, %arg5: memref<1x128xf32, #tpu.memory_space<vmem>>, %arg6: memref<128x32xbf16, #tpu.memory_space<vmem>>, %arg7: memref<1x32xf32, #tpu.memory_space<vmem>>, %arg8: memref<8x32xf32, #tpu.memory_space<vmem>>) attributes {dimension_semantics = [#tpu.dimension_semantics<parallel>], iteration_bounds = array<i64: 1>, scalar_prefetch = 0 : i64, scratch_operands = 0 : i64, tpu.core_type = #tpu.core_type<tc>, window_params = [{transform_indices = @transform_0, window_bounds = array<i64: 8, 17>}, {pipeline_mode = #tpu.pipeline_mode<synchronous>, transform_indices = @transform_1, window_bounds = array<i64: 17, 128>}, {pipeline_mode = #tpu.pipeline_mode<synchronous>, transform_indices = @transform_2, window_bounds = array<i64: 1, 128>}, {pipeline_mode = #tpu.pipeline_mode<synchronous>, transform_indices = @transform_3, window_bounds = array<i64: 128, 128>}, {pipeline_mode = #tpu.pipeline_mode<synchronous>, transform_indices = @transform_4, window_bounds = array<i64: 1, 128>}, {pipeline_mode = #tpu.pipeline_mode<synchronous>, transform_indices = @transform_5, window_bounds = array<i64: 128, 32>}, {pipeline_mode = #tpu.pipeline_mode<synchronous>, transform_indices = @transform_6, window_bounds = array<i64: 1, 32>}, {transform_indices = @transform_7, window_bounds = array<i64: 8, 32>}]} {
    %c0 = arith.constant 0 : index
    %c0_0 = arith.constant 0 : index
    %0 = vector.load %arg1[%c0, %c0_0] : memref<8x17xf32, #tpu.memory_space<vmem>>, vector<8x17xf32>
    %1 = arith.truncf %0 : vector<8x17xf32> to vector<8x17xbf16>
    %c0_1 = arith.constant 0 : index
    %c0_2 = arith.constant 0 : index
    %2 = vector.load %arg2[%c0_1, %c0_2] : memref<17x128xbf16, #tpu.memory_space<vmem>>, vector<17x128xbf16>
    %cst = arith.constant dense<0.000000e+00> : vector<8x128xf32>
    %3 = tpu.matmul %1, %2, %cst {dimension_numbers = #tpu.dot_dimension_numbers<[1], [0], [0], [1], [0, 0, 1, 1], [], []>} : vector<8x17xbf16>, vector<17x128xbf16>, vector<8x128xf32> -> vector<8x128xf32>
    %c0_3 = arith.constant 0 : index
    %c0_4 = arith.constant 0 : index
    %4 = vector.load %arg3[%c0_3, %c0_4] : memref<1x128xf32, #tpu.memory_space<vmem>>, vector<1x128xf32>
    %5 = vector.broadcast %4 : vector<1x128xf32> to vector<8x128xf32>
    %6 = arith.addf %3, %5 : vector<8x128xf32>
    %cst_5 = arith.constant 0.000000e+00 : f32
    %7 = vector.broadcast %cst_5 : f32 to vector<8x128xf32>
    %8 = arith.maximumf %6, %7 : vector<8x128xf32>
    %9 = arith.truncf %8 : vector<8x128xf32> to vector<8x128xbf16>
    %c0_6 = arith.constant 0 : index
    %c0_7 = arith.constant 0 : index
    %10 = vector.load %arg4[%c0_6, %c0_7] : memref<128x128xbf16, #tpu.memory_space<vmem>>, vector<128x128xbf16>
    %cst_8 = arith.constant dense<0.000000e+00> : vector<8x128xf32>
    %11 = tpu.matmul %9, %10, %cst_8 {dimension_numbers = #tpu.dot_dimension_numbers<[1], [0], [0], [1], [0, 0, 1, 1], [], []>} : vector<8x128xbf16>, vector<128x128xbf16>, vector<8x128xf32> -> vector<8x128xf32>
    %c0_9 = arith.constant 0 : index
    %c0_10 = arith.constant 0 : index
    %12 = vector.load %arg5[%c0_9, %c0_10] : memref<1x128xf32, #tpu.memory_space<vmem>>, vector<1x128xf32>
    %13 = vector.broadcast %12 : vector<1x128xf32> to vector<8x128xf32>
    %14 = arith.addf %11, %13 : vector<8x128xf32>
    %cst_11 = arith.constant 0.000000e+00 : f32
    %15 = vector.broadcast %cst_11 : f32 to vector<8x128xf32>
    %16 = arith.maximumf %14, %15 : vector<8x128xf32>
    %17 = arith.truncf %16 : vector<8x128xf32> to vector<8x128xbf16>
    %c0_12 = arith.constant 0 : index
    %c0_13 = arith.constant 0 : index
    %18 = vector.load %arg6[%c0_12, %c0_13] : memref<128x32xbf16, #tpu.memory_space<vmem>>, vector<128x32xbf16>
    %cst_14 = arith.constant dense<0.000000e+00> : vector<8x32xf32>
    %19 = tpu.matmul %17, %18, %cst_14 {dimension_numbers = #tpu.dot_dimension_numbers<[1], [0], [0], [1], [0, 0, 1, 1], [], []>} : vector<8x128xbf16>, vector<128x32xbf16>, vector<8x32xf32> -> vector<8x32xf32>
    %c0_15 = arith.constant 0 : index
    %c0_16 = arith.constant 0 : index
    %20 = vector.load %arg7[%c0_15, %c0_16] : memref<1x32xf32, #tpu.memory_space<vmem>>, vector<1x32xf32>
    %21 = vector.broadcast %20 : vector<1x32xf32> to vector<8x32xf32>
    %22 = arith.addf %19, %21 : vector<8x32xf32>
    %c0_17 = arith.constant 0 : index
    %c0_18 = arith.constant 0 : index
    %23 = vector.load %arg8[%c0_17, %c0_18] : memref<8x32xf32, #tpu.memory_space<vmem>>, vector<8x32xf32>
    tpu.vector_store %arg8[%c0_17, %c0_18], %22 {strides = array<i32>} : memref<8x32xf32, #tpu.memory_space<vmem>>, vector<8x32xf32>,
    return
  }
  func.func @transform_0(%arg0: i32) -> (i32, i32) {
    %c0_i32 = arith.constant 0 : i32
    %c0_i32_0 = arith.constant 0 : i32
    return %arg0, %c0_i32 : i32, i32
  }
  func.func @transform_1(%arg0: i32) -> (i32, i32) {
    %c0_i32 = arith.constant 0 : i32
    %c0_i32_0 = arith.constant 0 : i32
    %c0_i32_1 = arith.constant 0 : i32
    return %c0_i32, %c0_i32_0 : i32, i32
  }
  func.func @transform_2(%arg0: i32) -> (i32, i32) {
    %c0_i32 = arith.constant 0 : i32
    %c0_i32_0 = arith.constant 0 : i32
    %c0_i32_1 = arith.constant 0 : i32
    return %c0_i32, %c0_i32_0 : i32, i32
  }
  func.func @transform_3(%arg0: i32) -> (i32, i32) {
    %c0_i32 = arith.constant 0 : i32
    %c0_i32_0 = arith.constant 0 : i32
    %c0_i32_1 = arith.constant 0 : i32
    return %c0_i32, %c0_i32_0 : i32, i32
  }
  func.func @transform_4(%arg0: i32) -> (i32, i32) {
    %c0_i32 = arith.constant 0 : i32
    %c0_i32_0 = arith.constant 0 : i32
    %c0_i32_1 = arith.constant 0 : i32
    return %c0_i32, %c0_i32_0 : i32, i32
  }
  func.func @transform_5(%arg0: i32) -> (i32, i32) {
    %c0_i32 = arith.constant 0 : i32
    %c0_i32_0 = arith.constant 0 : i32
    %c0_i32_1 = arith.constant 0 : i32
    return %c0_i32, %c0_i32_0 : i32, i32
  }
  func.func @transform_6(%arg0: i32) -> (i32, i32) {
    %c0_i32 = arith.constant 0 : i32
    %c0_i32_0 = arith.constant 0 : i32
    %c0_i32_1 = arith.constant 0 : i32
    return %c0_i32, %c0_i32_0 : i32, i32
  }
  func.func @transform_7(%arg0: i32) -> (i32, i32) {
    %c0_i32 = arith.constant 0 : i32
    %c0_i32_0 = arith.constant 0 : i32
    return %arg0, %c0_i32 : i32, i32
  }
}

</mosaic_0001>

<llo_original>
// kernel: tpu_custom_call.1
$region0: #{tpu_custom_call.1}
  #allocation0 [shape = 'u32[]', space=smem, size = 0x4, offset = 0x4, fixed_abs, tag = 'smem constant byte address 0x4 - core index']
  #allocation1 [shape = 'u32[144,128]{1,0:T(1,128)}', space=vmem, size = 0x12000, scoped, tag = 'internal scratch']
  %s0 = inlined_call_operand.vmem [shape: f32[8,17], index: 0, kind: input, shape index: {}]
  %s1 = inlined_call_operand.vmem [shape: bf16[17,128], index: 1, kind: input, shape index: {}]
  %s2 = inlined_call_operand.vmem [shape: f32[1,128], index: 2, kind: input, shape index: {}]
  %s3 = inlined_call_operand.vmem [shape: bf16[128,128], index: 3, kind: input, shape index: {}]
  %s4 = inlined_call_operand.vmem [shape: f32[1,128], index: 4, kind: input, shape index: {}]
  %s5 = inlined_call_operand.vmem [shape: bf16[128,32], index: 5, kind: input, shape index: {}]
  %s6 = inlined_call_operand.vmem [shape: f32[1,32], index: 6, kind: input, shape index: {}]
  %s7 = inlined_call_operand.hbm [shape: f32[8,32], index: 7, kind: output, shape index: {}]
  %s8 = sld [smem:[#allocation0]]
  $region38: #{tpu_custom_call.1} parent=0
    _
  %s10 = ssub.s32 1, %s8
  %s11 = scalar_select 0, %s10, %s8
  $region1: #{tpu_custom_call.1} parent=0
    #allocation2 [shape = 'u8[4096]{0}', space=vmem, size = 0x1000, scoped, tag = 'output window, operand 0, single buffered']
    #allocation3 [shape = 's32[1]{0}', space=sflag, size = 0x4, scoped, tag = 'scoped memory for tpu_custom_call.1']
    %12 = vsyncpa [#allocation3], 0
    // Predicated region
    $region2: #{tpu_custom_call.1} parent=1 // pred_check
      _
    $region3: #{tpu_custom_call.1} parent=1 // pred_check_branch
      %14 = sbr.rel (0) target = $region5
    $region4: #{tpu_custom_call.1} parent=1 // pred_region
      _
    $region5: #{tpu_custom_call.1} parent=1 // pred_fallthru
      _
    // Predicated region
    $region6: #{tpu_custom_call.1} parent=1 // pred_check
      _
    $region7: #{tpu_custom_call.1} parent=1 // pred_check_branch
      %16 = sbr.rel (0) target = $region9
    $region8: #{tpu_custom_call.1} parent=1 // pred_region
      _
    $region9: #{tpu_custom_call.1} parent=1 // pred_fallthru
      _
    // Predicated region
    $region10: #{tpu_custom_call.1} parent=1 // pred_check
      _
    $region11: #{tpu_custom_call.1} parent=1 // pred_check_branch
      %18 = sbr.rel (0) target = $region13
    $region12: #{tpu_custom_call.1} parent=1 // pred_region
      _
    $region13: #{tpu_custom_call.1} parent=1 // pred_fallthru
      _
    // Predicated region
    $region14: #{tpu_custom_call.1} parent=1 // pred_check
      _
    $region15: #{tpu_custom_call.1} parent=1 // pred_check_branch
      %20 = sbr.rel (0) target = $region17
    $region16: #{tpu_custom_call.1} parent=1 // pred_region
      _
    $region17: #{tpu_custom_call.1} parent=1 // pred_fallthru
      _
    // Predicated region
    $region18: #{tpu_custom_call.1} parent=1 // pred_check
      _
    $region19: #{tpu_custom_call.1} parent=1 // pred_check_branch
      %22 = sbr.rel (0) target = $region21
    $region20: #{tpu_custom_call.1} parent=1 // pred_region
      _
    $region21: #{tpu_custom_call.1} parent=1 // pred_fallthru
      _
    // Predicated region
    $region22: #{tpu_custom_call.1} parent=1 // pred_check
      _
    $region23: #{tpu_custom_call.1} parent=1 // pred_check_branch
      %24 = sbr.rel (0) target = $region25
    $region24: #{tpu_custom_call.1} parent=1 // pred_region
      _
    $region25: #{tpu_custom_call.1} parent=1 // pred_fallthru
      _
    // Predicated region
    $region26: #{tpu_custom_call.1} parent=1 // pred_check
      _
    $region27: #{tpu_custom_call.1} parent=1 // pred_check_branch
      %26 = sbr.rel (0) target = $region29
    $region28: #{tpu_custom_call.1} parent=1 // pred_region
      _
    $region29: #{tpu_custom_call.1} parent=1 // pred_fallthru
      _
    %v28 = vld [vmem:[%s0] sm:$0xff]
    %v29 = vpack.c.bf16 %v28, %v28
    %v30 = vld [vmem:[%s1] sm:$0xf]
    %v31 = vld [vmem:[%s1 + $0x4] sm:$0xf]
    %v32 = vld [vmem:[%s1 + $0x8] sm:$0x1]
    %v33 = vld [vmem:[%s2] sm:$0x1]
    %v35 = vlaneseq
    %v36 = vshrl.u32 %v35, 7
    %v37 = vsub.s32 0, %v36
    %v38 = vrot.slane %v33, %v37
    %v43 = vunpack.c.l.b16 %v30
    %v44 = vunpack.c.l.b16 %v31
    %v45 = vunpack.c.l.b16 %v32
    %v46 = vpack.c.b16 %v44, %v43
    %v47 = vpack.c.b16 %v45, %v45
    %vm49 = vcmask 138240
    %v51 = vsel %vm49, %v29, 0
    %vm53 = vcmask 1040384
    %v54 = vsel 0, 4294967295, 65535
    %v55 = vsel %vm53, %v54, 0
    %v57 = vand.u32 %v47, %v55
    %59 = vmatprep.subr.bf16.mxu0 0
    %60 = vmatpush1.bf16.msra.mxu0 0
    %61 = vmatprep.subr.bf16.mxu0 0
    %62 = vmatpush1.bf16.msra.mxu0 0
    %63 = vmatprep.subr.bf16.mxu0 0
    %64 = vmatpush1.bf16.msra.mxu0 0
    %65 = vmatprep.subr.bf16.mxu0 0
    %66 = vmatpush1.bf16.msra.mxu0 0
    %67 = vmatprep.subr.bf16.mxu0 0
    %68 = vmatpush1.bf16.msra.mxu0 0
    %69 = vmatprep.subr.bf16.mxu0 0
    %70 = vmatpush1.bf16.msra.mxu0 0
    %71 = vmatprep.subr.bf16.mxu0 0
    %72 = vmatpush1.bf16.msra.mxu0 %v57
    %73 = vmatprep.subr.bf16.mxu0 0
    %74 = vmatpush1.bf16.msra.mxu0 %v46
    %75 = vmatprep.subr.bf16.mxu0 0
    %76 = vmatpush2.bf16.msra.mxu0 0
    %77 = vmatprep.subr.bf16.mxu0 0
    %78 = vmatpush2.bf16.msra.mxu0 0
    %79 = vmatprep.subr.bf16.mxu0 0
    %80 = vmatpush2.bf16.msra.mxu0 0
    %81 = vmatprep.subr.bf16.mxu0 0
    %82 = vmatpush2.bf16.msra.mxu0 0
    %83 = vmatprep.subr.bf16.mxu0 0
    %84 = vmatpush2.bf16.msra.mxu0 0
    %85 = vmatprep.subr.bf16.mxu0 0
    %86 = vmatpush2.bf16.msra.mxu0 0
    %87 = vmatprep.subr.bf16.mxu0 0
    %88 = vmatpush2.bf16.msra.mxu0 0
    %89 = vmatprep.subr.bf16.mxu0 0
    %90 = vmatpush2.bf16.msra.mxu0 0
    %91 = vmatprep.mubr.bf16.mxu0 0
    %92 = vmatmul.mubr.bf16.gmra.mxu0 %v51
    %v93 = vpop.f32.mrf.mxu0
    %v94 = vadd.f32 %v38, %v93
    %v95 = vpop.f32.mrf.mxu0
    %v96 = vpop.f32.mrf.mxu0
    %v97 = vpop.f32.mrf.mxu0
    %98 = vdwg.mxu0
    %v99 = vmax.f32 %v94, 0.0
    %v100 = vpack.c.bf16 %v99, %v99
    %v101 = vld [vmem:[%s3] sm:$0xf]
    %v102 = vld [vmem:[%s3 + $0x4] sm:$0xf]
    %v103 = vld [vmem:[%s3 + $0x8] sm:$0xf]
    %v104 = vld [vmem:[%s3 + $0xc] sm:$0xf]
    %v105 = vld [vmem:[%s3 + $0x10] sm:$0xf]
    %v106 = vld [vmem:[%s3 + $0x14] sm:$0xf]
    %v107 = vld [vmem:[%s3 + $0x18] sm:$0xf]
    %v108 = vld [vmem:[%s3 + $0x1c] sm:$0xf]
    %v109 = vld [vmem:[%s3 + $0x20] sm:$0xf]
    %v110 = vld [vmem:[%s3 + $0x24] sm:$0xf]
    %v111 = vld [vmem:[%s3 + $0x28] sm:$0xf]
    %v112 = vld [vmem:[%s3 + $0x2c] sm:$0xf]
    %v113 = vld [vmem:[%s3 + $0x30] sm:$0xf]
    %v114 = vld [vmem:[%s3 + $0x34] sm:$0xf]
    %v115 = vld [vmem:[%s3 + $0x38] sm:$0xf]
    %v116 = vld [vmem:[%s3 + $0x3c] sm:$0xf]
    %v117 = vld [vmem:[%s4] sm:$0x1]
    %v119 = vlaneseq
    %v120 = vshrl.u32 %v119, 7
    %v121 = vsub.s32 0, %v120
    %v122 = vrot.slane %v117, %v121
    %v140 = vunpack.c.l.b16 %v101
    %v141 = vunpack.c.l.b16 %v102
    %v142 = vunpack.c.l.b16 %v103
    %v143 = vunpack.c.l.b16 %v104
    %v144 = vunpack.c.l.b16 %v105
    %v145 = vunpack.c.l.b16 %v106
    %v146 = vunpack.c.l.b16 %v107
    %v147 = vunpack.c.l.b16 %v108
    %v148 = vunpack.c.l.b16 %v109
    %v149 = vunpack.c.l.b16 %v110
    %v150 = vunpack.c.l.b16 %v111
    %v151 = vunpack.c.l.b16 %v112
    %v152 = vunpack.c.l.b16 %v113
    %v153 = vunpack.c.l.b16 %v114
    %v154 = vunpack.c.l.b16 %v115
    %v155 = vunpack.c.l.b16 %v116
    %v156 = vpack.c.b16 %v141, %v140
    %v157 = vpack.c.b16 %v143, %v142
    %v158 = vpack.c.b16 %v145, %v144
    %v159 = vpack.c.b16 %v147, %v146
    %v160 = vpack.c.b16 %v149, %v148
    %v161 = vpack.c.b16 %v151, %v150
    %v162 = vpack.c.b16 %v153, %v152
    %v163 = vpack.c.b16 %v155, %v154
    %172 = vmatprep.subr.bf16.mxu0 0
    %173 = vmatpush1.bf16.msra.mxu0 %v163
    %174 = vmatprep.subr.bf16.mxu0 0
    %175 = vmatpush1.bf16.msra.mxu0 %v162
    %176 = vmatprep.subr.bf16.mxu0 0
    %177 = vmatpush1.bf16.msra.mxu0 %v161
    %178 = vmatprep.subr.bf16.mxu0 0
    %179 = vmatpush1.bf16.msra.mxu0 %v160
    %180 = vmatprep.subr.bf16.mxu0 0
    %181 = vmatpush1.bf16.msra.mxu0 %v159
    %182 = vmatprep.subr.bf16.mxu0 0
    %183 = vmatpush1.bf16.msra.mxu0 %v158
    %184 = vmatprep.subr.bf16.mxu0 0
    %185 = vmatpush1.bf16.msra.mxu0 %v157
    %186 = vmatprep.subr.bf16.mxu0 0
    %187 = vmatpush1.bf16.msra.mxu0 %v156
    %188 = vmatprep.subr.bf16.mxu0 0
    %189 = vmatpush2.bf16.msra.mxu0 0
    %190 = vmatprep.subr.bf16.mxu0 0
    %191 = vmatpush2.bf16.msra.mxu0 0
    %192 = vmatprep.subr.bf16.mxu0 0
    %193 = vmatpush2.bf16.msra.mxu0 0
    %194 = vmatprep.subr.bf16.mxu0 0
    %195 = vmatpush2.bf16.msra.mxu0 0
    %196 = vmatprep.subr.bf16.mxu0 0
    %197 = vmatpush2.bf16.msra.mxu0 0
    %198 = vmatprep.subr.bf16.mxu0 0
    %199 = vmatpush2.bf16.msra.mxu0 0
    %200 = vmatprep.subr.bf16.mxu0 0
    %201 = vmatpush2.bf16.msra.mxu0 0
    %202 = vmatprep.subr.bf16.mxu0 0
    %203 = vmatpush2.bf16.msra.mxu0 0
    %204 = vmatprep.mubr.bf16.mxu0 0
    %205 = vmatmul.mubr.bf16.gmra.mxu0 %v100
    %v206 = vpop.f32.mrf.mxu0
    %v207 = vadd.f32 %v122, %v206
    %v208 = vpop.f32.mrf.mxu0
    %v209 = vpop.f32.mrf.mxu0
    %v210 = vpop.f32.mrf.mxu0
    %211 = vdwg.mxu0
    %v212 = vmax.f32 %v207, 0.0
    %v213 = vpack.c.bf16 %v212, %v212
    %v214 = vld [vmem:[%s5] sm:$0xf]
    %v215 = vld [vmem:[%s5 + $0x4] sm:$0xf]
    %v216 = vld [vmem:[%s5 + $0x8] sm:$0xf]
    %v217 = vld [vmem:[%s5 + $0xc] sm:$0xf]
    %v218 = vld [vmem:[%s5 + $0x10] sm:$0xf]
    %v219 = vld [vmem:[%s5 + $0x14] sm:$0xf]
    %v220 = vld [vmem:[%s5 + $0x18] sm:$0xf]
    %v221 = vld [vmem:[%s5 + $0x1c] sm:$0xf]
    %v222 = vld [vmem:[%s5 + $0x20] sm:$0xf]
    %v223 = vld [vmem:[%s5 + $0x24] sm:$0xf]
    %v224 = vld [vmem:[%s5 + $0x28] sm:$0xf]
    %v225 = vld [vmem:[%s5 + $0x2c] sm:$0xf]
    %v226 = vld [vmem:[%s5 + $0x30] sm:$0xf]
    %v227 = vld [vmem:[%s5 + $0x34] sm:$0xf]
    %v228 = vld [vmem:[%s5 + $0x38] sm:$0xf]
    %v229 = vld [vmem:[%s5 + $0x3c] sm:$0xf]
    %v230 = vld [vmem:[%s6] sm:$0x1]
    %v232 = vlaneseq
    %v233 = vshrl.u32 %v232, 7
    %v234 = vsub.s32 0, %v233
    %v235 = vrot.slane %v230, %v234
    %v253 = vunpack.c.l.b16 %v214
    %v254 = vunpack.c.l.b16 %v215
    %v255 = vunpack.c.l.b16 %v216
    %v256 = vunpack.c.l.b16 %v217
    %v257 = vunpack.c.l.b16 %v218
    %v258 = vunpack.c.l.b16 %v219
    %v259 = vunpack.c.l.b16 %v220
    %v260 = vunpack.c.l.b16 %v221
    %v261 = vunpack.c.l.b16 %v222
    %v262 = vunpack.c.l.b16 %v223
    %v263 = vunpack.c.l.b16 %v224
    %v264 = vunpack.c.l.b16 %v225
    %v265 = vunpack.c.l.b16 %v226
    %v266 = vunpack.c.l.b16 %v227
    %v267 = vunpack.c.l.b16 %v228
    %v268 = vunpack.c.l.b16 %v229
    %v269 = vpack.c.b16 %v254, %v253
    %v270 = vpack.c.b16 %v256, %v255
    %v271 = vpack.c.b16 %v258, %v257
    %v272 = vpack.c.b16 %v260, %v259
    %v273 = vpack.c.b16 %v262, %v261
    %v274 = vpack.c.b16 %v264, %v263
    %v275 = vpack.c.b16 %v266, %v265
    %v276 = vpack.c.b16 %v268, %v267
    %285 = vmatprep.subr.bf16.mxu0 0
    %286 = vmatpush1.bf16.msra.mxu0 %v276
    %287 = vmatprep.subr.bf16.mxu0 0
    %288 = vmatpush1.bf16.msra.mxu0 %v275
    %289 = vmatprep.subr.bf16.mxu0 0
    %290 = vmatpush1.bf16.msra.mxu0 %v274
    %291 = vmatprep.subr.bf16.mxu0 0
    %292 = vmatpush1.bf16.msra.mxu0 %v273
    %293 = vmatprep.subr.bf16.mxu0 0
    %294 = vmatpush1.bf16.msra.mxu0 %v272
    %295 = vmatprep.subr.bf16.mxu0 0
    %296 = vmatpush1.bf16.msra.mxu0 %v271
    %297 = vmatprep.subr.bf16.mxu0 0
    %298 = vmatpush1.bf16.msra.mxu0 %v270
    %299 = vmatprep.subr.bf16.mxu0 0
    %300 = vmatpush1.bf16.msra.mxu0 %v269
    %301 = vmatprep.subr.bf16.mxu0 0
    %302 = vmatpush2.bf16.msra.mxu0 0
    %303 = vmatprep.subr.bf16.mxu0 0
    %304 = vmatpush2.bf16.msra.mxu0 0
    %305 = vmatprep.subr.bf16.mxu0 0
    %306 = vmatpush2.bf16.msra.mxu0 0
    %307 = vmatprep.subr.bf16.mxu0 0
    %308 = vmatpush2.bf16.msra.mxu0 0
    %309 = vmatprep.subr.bf16.mxu0 0
    %310 = vmatpush2.bf16.msra.mxu0 0
    %311 = vmatprep.subr.bf16.mxu0 0
    %312 = vmatpush2.bf16.msra.mxu0 0
    %313 = vmatprep.subr.bf16.mxu0 0
    %314 = vmatpush2.bf16.msra.mxu0 0
    %315 = vmatprep.subr.bf16.mxu0 0
    %316 = vmatpush2.bf16.msra.mxu0 0
    %317 = vmatprep.mubr.bf16.mxu0 0
    %318 = vmatmul.mubr.bf16.gmra.mxu0 %v213
    %v319 = vpop.f32.mrf.mxu0
    %v320 = vadd.f32 %v235, %v319
    %v321 = vpop.f32.mrf.mxu0
    %v322 = vpop.f32.mrf.mxu0
    %v323 = vpop.f32.mrf.mxu0
    %324 = vdwg.mxu0
    %vm325 = vcmask 261120
    %326 = vst.msk [vmem:[#allocation2] sm:$0xff] %vm325, %v320
    // Predicated region
    $region30: #{tpu_custom_call.1} parent=1 // pred_check
      _
    $region31: #{tpu_custom_call.1} parent=1 // pred_check_branch
      %328 = sbr.rel (0) target = $region33
    $region32: #{tpu_custom_call.1} parent=1 // pred_region
      %s330 = ssub.s32 128, 128
      %331 = vsyncadd [#allocation3], %s330
      %s333 = sshll.u32 [#allocation2], 4
      %s334 = int_to_ptr.vmem [resolvable:$true] %s333
      %336 = dma.vmem_to_hbm [thread:$0]  %s334, 128, %s7, [#allocation3]
    $region33: #{tpu_custom_call.1} parent=1 // pred_fallthru
      _
    // Predicated region
    $region34: #{tpu_custom_call.1} parent=1 // pred_check
      _
    $region35: #{tpu_custom_call.1} parent=1 // pred_check_branch
      %338 = sbr.rel (0) target = $region37
    $region36: #{tpu_custom_call.1} parent=1 // pred_region
      %339 = dma.done [#allocation3], 128
    $region37: #{tpu_custom_call.1} parent=1 // pred_fallthru
      _
    %340 = vsyncpa [#allocation3], 1

</llo_original>
